<compile_context>
chip_gen: v7x
topology: tpu7x:2x2x1
jax: 0.10.0
libtpu: 0.0.40
codegen_flags: <defaults>
</compile_context>

<pallas_src>
import jax
import jax.numpy as jnp
from jax.experimental import pallas as pl
from jax.experimental.pallas import tpu as pltpu


def _round_up(x, m):
    return ((x + m - 1) // m) * m


# ----------------------------------------------------------------------------
# Pallas attention kernel
# ----------------------------------------------------------------------------
def _attention_body(h_ref, w_ref, u_ref, bias_ref, ctx_ref, wts_ref):
    # h_ref:    (TB, L, H)   activations for TB batch elements (native dtype)
    # w_ref:    (H, A)       linear weight, pre-transposed
    # u_ref:    (1, A)       context weight as a lane-dense row
    # bias_ref: (TB, L) f32  additive mask bias (0 / -inf), or None (no mask)
    # ctx_ref:  (TB, HP)     output context vectors, HP = round_up(H, 128)
    # wts_ref:  (TB, LP)     output attention weights, LP = round_up(L, 128)
    tb, L, H = h_ref.shape
    A = w_ref.shape[1]
    HP = ctx_ref.shape[-1]
    LP = wts_ref.shape[-1]

    h = h_ref[...]                                       # (TB, L, H), native dtype

    # Fold batch into the MXU M dimension: (TB*L, H) @ (H, A) -> (TB*L, A).
    # (L is a multiple of 8 here, so the collapse is layout-preserving for f32.)
    proj = jnp.tanh(
        jnp.dot(h.reshape(tb * L, H), w_ref[...],
                preferred_element_type=jnp.float32))
    proj = proj.reshape(tb, L, A)                        # (TB, L, A), f32

    # Context projection as a VPU multiply + lane reduce (avoids an N=1 matmul).
    u = u_ref[...].astype(jnp.float32)                   # (1, A)
    scores = jnp.sum(proj * u[None, :, :], axis=-1)      # (TB, L), L on lanes

    # masked_fill_(mask, -inf) as a single additive bias (0 / -inf).
    # Fully-masked rows produce NaN, exactly like PyTorch masked_fill + softmax.
    if bias_ref is not None:
        scores = scores + bias_ref[...]

    # Softmax over the lane (length) axis. Exact divide: the kernel is
    # overhead-bound, so exact normalization is free (rows sum to 1 in f32).
    m = jnp.max(scores, axis=-1, keepdims=True)          # (TB, 1)
    e = jnp.exp(scores - m)                               # (TB, L)
    denom = jnp.sum(e, axis=-1, keepdims=True)            # (TB, 1)
    w = e / denom                                          # (TB, L), f32

    # bmm(weights.unsqueeze(1), h_src).squeeze(1)  ==  sum_l w[., l] * h[., l, :]
    if h.dtype == jnp.float32:
        ctx = jnp.sum(w[:, :, None] * h, axis=1)           # (TB, H) f32
    else:
        # bf16 path: multiply in bf16 (native VPU on v6e/v7x), accumulate in f32.
        ctx = jnp.sum((w.astype(h.dtype))[:, :, None] * h, axis=1,
                      dtype=jnp.float32)

    # Lane-dense stores: pad the last dim up to a full 128-lane tile with zeros
    # so the vreg->VMEM stores are unmasked dense `vst` (not per-row vst.msk).
    if LP > L:
        w = jnp.concatenate(
            [w, jnp.zeros((tb, LP - L), jnp.float32)], axis=-1)
    if HP > H:
        ctx = jnp.concatenate(
            [ctx, jnp.zeros((tb, HP - H), jnp.float32)], axis=-1)

    wts_ref[...] = w
    ctx_ref[...] = ctx.astype(ctx_ref.dtype)


def _attention_kernel_masked(h_ref, w_ref, u_ref, bias_ref, ctx_ref, wts_ref):
    _attention_body(h_ref, w_ref, u_ref, bias_ref, ctx_ref, wts_ref)


def _attention_kernel_unmasked(h_ref, w_ref, u_ref, ctx_ref, wts_ref):
    _attention_body(h_ref, w_ref, u_ref, None, ctx_ref, wts_ref)


# ----------------------------------------------------------------------------
# Chip-aware configuration and block selection
# ----------------------------------------------------------------------------
def _tpu_config():
    """Return (num_tensorcores, physical VMEM bytes per core) with safe fallbacks."""
    cores, vmem = 1, 128 * 1024 * 1024            # v5e / v6e defaults
    try:
        kind = jax.devices()[0].device_kind.lower()
        if ("v7" in kind) or ("7x" in kind) or kind.startswith("tpu7"):
            cores, vmem = 2, 64 * 1024 * 1024     # v7x: 2 TC/chip, 64 MiB VMEM
        elif ("v4" in kind) or ("v5p" in kind) or ("v5 p" in kind):
            cores, vmem = 2, 128 * 1024 * 1024    # megacore parts
        elif "v3" in kind:
            cores, vmem = 2, 16 * 1024 * 1024
    except Exception:
        pass
    return cores, vmem


def _pick_block_batch(batch, length, hidden, attn, lp, hp, itemsize,
                      num_cores, vmem_bytes):
    """Choose TB (block batch).

    Rules (per review):
      * TB must keep the output block's second-minor dim sublane aligned
        (multiple of 8) or cover the whole batch.
      * Take the biggest block whose double-buffered working set fits well
        under the chip's VMEM.
      * Single-TensorCore chips: the largest fitting block wins, even if
        grid == 1.  Multi-TC chips: prefer >= 2 pipelined steps per core so
        the h-block DMA overlaps compute; then >= 1 step per core.
    """
    cands = [d for d in range(1, batch + 1)
             if batch % d == 0 and (d % 8 == 0 or d == batch)]

    budget = vmem_bytes // 2           # leave headroom for compiler scratch

    def block_bytes(d):
        per_step = (d * length * hidden * itemsize    # h block
                    + d * length * 4                  # mask bias block
                    + d * hp * itemsize               # ctx output block
                    + d * lp * 4)                     # weights output block
        fixed = hidden * attn * itemsize + attn * 4   # weight + context row
        return 2 * (per_step + fixed)                 # double-buffered

    fitting = [d for d in cands if block_bytes(d) <= budget]
    if not fitting:
        fitting = [min(cands)]

    if num_cores <= 1:
        return max(fitting)
    for min_steps in (2 * num_cores, num_cores):
        ok = [d for d in fitting if batch // d >= min_steps]
        if ok:
            return max(ok)
    return max(fitting)


# ----------------------------------------------------------------------------
# Wrapper
# ----------------------------------------------------------------------------
def attention_pallas(h_src, linear_weight, context_weight, mask=None,
                     block_batch=None):
    """Pallas equivalent of Attention.forward.

    h_src:          (B, L, H) activations (f32 or bf16)
    linear_weight:  (A, H)    nn.Linear(hidden, attention, bias=False).weight
    context_weight: (A, 1)
    mask:           (B, L) bool/int, True => masked out; or None
    returns (context_vectors (B, H), weights (B, L) f32)
    """
    B, L, H = h_src.shape
    A = linear_weight.shape[0]

    in_dtype = h_src.dtype
    itemsize = h_src.dtype.itemsize
    # Keep matmul operands in the activation dtype (bf16 stays bf16 -> half the
    # HBM traffic); accumulation is forced to f32 inside the kernel.
    w_t = jnp.asarray(linear_weight, in_dtype).T                  # (H, A)
    u_row = jnp.asarray(context_weight, jnp.float32).reshape(1, A)

    # Lane-dense output slabs: pad last dims up to a full 128-lane tile.
    LP = _round_up(L, 128)
    HP = _round_up(H, 128)

    num_cores, vmem_phys = _tpu_config()
    if block_batch is None:
        tb = _pick_block_batch(B, L, H, A, LP, HP, itemsize,
                               num_cores, vmem_phys)
    else:
        tb = int(block_batch)
        if B % tb or not (tb % 8 == 0 or tb == B):
            raise ValueError(
                f"block_batch {tb} must divide batch {B} and be a multiple of "
                f"8 (or equal the full batch) to satisfy TPU tiling rules")
    grid = (B // tb,)

    has_mask = mask is not None
    in_specs = [
        pl.BlockSpec((tb, L, H), lambda b: (b, 0, 0)),
        pl.BlockSpec((H, A), lambda b: (0, 0)),
        pl.BlockSpec((1, A), lambda b: (0, 0)),
    ]
    args = [h_src, w_t, u_row]
    if has_mask:
        # Precomputed additive bias: 0 where valid, -inf where masked.
        bias = jnp.where(jnp.asarray(mask, bool).reshape(B, L),
                         -jnp.inf, 0.0).astype(jnp.float32)
        in_specs.append(pl.BlockSpec((tb, L), lambda b: (b, 0)))
        args.append(bias)
        kernel = _attention_kernel_masked
    else:
        kernel = _attention_kernel_unmasked

    ctx_pad, wts_pad = pl.pallas_call(
        kernel,
        out_shape=(
            jax.ShapeDtypeStruct((B, HP), in_dtype),
            jax.ShapeDtypeStruct((B, LP), jnp.float32),
        ),
        grid_spec=pltpu.PrefetchScalarGridSpec(
            num_scalar_prefetch=0,
            grid=grid,
            in_specs=in_specs,
            out_specs=[
                pl.BlockSpec((tb, HP), lambda b: (b, 0)),
                pl.BlockSpec((tb, LP), lambda b: (b, 0)),
            ],
        ),
        compiler_params=pltpu.CompilerParams(
            dimension_semantics=("parallel",),
            vmem_limit_bytes=int(vmem_phys * 3 // 4)),
    )(*args)

    # Slice the lane padding back off (pure layout plumbing in the wrapper).
    ctx = ctx_pad[:, :H] if HP > H else ctx_pad
    wts = wts_pad[:, :L] if LP > L else wts_pad
    return ctx, wts


# ----------------------------------------------------------------------------
# Pure-JAX pieces of SentenceAttention (GRU + mask) and the attention reference
# ----------------------------------------------------------------------------
def _gru_cell(x_t, h, w_ih, w_hh, b_ih, b_hh):
    gi = x_t @ w_ih.T + b_ih
    gh = h @ w_hh.T + b_hh
    i_r, i_z, i_n = jnp.split(gi, 3, axis=-1)
    h_r, h_z, h_n = jnp.split(gh, 3, axis=-1)
    r = jax.nn.sigmoid(i_r + h_r)
    z = jax.nn.sigmoid(i_z + h_z)
    n = jnp.tanh(i_n + r * h_n)
    return (1.0 - z) * n + z * h


def _gru_direction(x, lengths, w_ih, w_hh, b_ih, b_hh, reverse):
    # Emulates pack_padded_sequence: padded steps do not update the hidden
    # state and produce zero outputs (as pad_packed_sequence would).
    B, T, _ = x.shape
    Hd = w_hh.shape[1]
    x_tm = jnp.swapaxes(x, 0, 1)                     # (T, B, I)
    t_idx = jnp.arange(T)
    if reverse:
        x_tm = x_tm[::-1]
        t_idx = t_idx[::-1]

    def step(h, inp):
        x_t, t = inp
        valid = (t < lengths)[:, None]               # (B, 1)
        h_new = _gru_cell(x_t, h, w_ih, w_hh, b_ih, b_hh)
        h = jnp.where(valid, h_new, h)
        return h, jnp.where(valid, h, 0.0)

    h0 = jnp.zeros((B, Hd), x.dtype)
    _, outs = jax.lax.scan(step, h0, (x_tm, t_idx))  # (T, B, Hd)
    if reverse:
        outs = outs[::-1]
    return jnp.swapaxes(outs, 0, 1)                  # (B, T, Hd)


def bigru(x, lengths, p):
    # TODO(synk): nn.GRU recurrence kept in plain JAX (no clean Pallas mapping).
    fwd = _gru_direction(x, lengths, p["wi_f"], p["wh_f"], p["bi_f"], p["bh_f"], False)
    bwd = _gru_direction(x, lengths, p["wi_b"], p["wh_b"], p["bi_b"], p["bh_b"], True)
    return jnp.concatenate([fwd, bwd], axis=-1)


def generate_mask(lengths, max_length):
    # True where the position is padding (SentenceAttention.generate_mask).
    return jnp.arange(max_length)[None, :] >= lengths[:, None]


def attention_ref(h_src, linear_weight, context_weight, mask=None):
    """Pure-JAX reference mirroring the PyTorch Attention.forward."""
    proj = jnp.tanh(jnp.einsum("blh,ah->bla", h_src, linear_weight))
    scores = jnp.einsum("bla,a->bl", proj, context_weight[:, 0])
    if mask is not None:
        scores = jnp.where(mask, -jnp.inf, scores)
    w = jax.nn.softmax(scores, axis=-1)
    ctx = jnp.einsum("bl,blh->bh", w, h_src)
    return ctx, w


# ----------------------------------------------------------------------------
if __name__ == "__main__":
    B, L = 16, 8                                     # documents, max segments
    input_size, hidden_size, attention_size = 16, 32, 16
    Hd = hidden_size // 2

    key = jax.random.PRNGKey(0)
    ks = jax.random.split(key, 8)

    packed_segments = jax.random.normal(ks[0], (B, L, input_size), jnp.float32)
    segment_per_document = jnp.array(
        [8, 7, 6, 5, 8, 4, 3, 8, 2, 8, 5, 6, 7, 8, 1, 8], jnp.int32)

    gru_params = {
        "wi_f": 0.1 * jax.random.normal(ks[1], (3 * Hd, input_size), jnp.float32),
        "wh_f": 0.1 * jax.random.normal(ks[2], (3 * Hd, Hd), jnp.float32),
        "bi_f": jnp.zeros((3 * Hd,), jnp.float32),
        "bh_f": jnp.zeros((3 * Hd,), jnp.float32),
        "wi_b": 0.1 * jax.random.normal(ks[3], (3 * Hd, input_size), jnp.float32),
        "wh_b": 0.1 * jax.random.normal(ks[4], (3 * Hd, Hd), jnp.float32),
        "bi_b": jnp.zeros((3 * Hd,), jnp.float32),
        "bh_b": jnp.zeros((3 * Hd,), jnp.float32),
    }
    linear_weight = 0.02 * jax.random.normal(
        ks[5], (attention_size, hidden_size), jnp.float32)
    context_weight = 0.02 * jax.random.normal(
        ks[6], (attention_size, 1), jnp.float32)

    # SentenceAttention.forward: biGRU (plain JAX) -> mask -> Pallas attention.
    h_src = bigru(packed_segments, segment_per_document, gru_params)  # (B, L, H)
    mask = generate_mask(segment_per_document, L)                     # (B, L)

    ctx, wts = attention_pallas(h_src, linear_weight, context_weight, mask)
    jax.block_until_ready((ctx, wts))
    ctx_r, wts_r = attention_ref(h_src, linear_weight, context_weight, mask)

    # Unmasked path as well (separate kernel variant, no bias stream).
    ctx_u, wts_u = attention_pallas(h_src, linear_weight, context_weight, None)
    jax.block_until_ready((ctx_u, wts_u))
    ctx_ur, wts_ur = attention_ref(h_src, linear_weight, context_weight, None)

    assert ctx.shape == (B, hidden_size) and wts.shape == (B, L)
    assert jnp.allclose(ctx, ctx_r, atol=1e-3, rtol=1e-3)
    assert jnp.allclose(wts, wts_r, atol=1e-3, rtol=1e-3)
    assert jnp.allclose(ctx_u, ctx_ur, atol=1e-3, rtol=1e-3)
    assert jnp.allclose(wts_u, wts_ur, atol=1e-3, rtol=1e-3)
    # Padded positions carry exactly zero weight; rows are exactly normalized.
    pad = jnp.arange(L)[None, :] >= segment_per_document[:, None]
    assert float(jnp.max(jnp.where(pad, jnp.abs(wts), 0.0))) == 0.0
    assert jnp.allclose(jnp.sum(wts, axis=-1), 1.0, atol=1e-5)

    print("KERNEL_OK")
</pallas_src>

<mosaic_0001>
module attributes {stable_mosaic.version = 11 : i64} {
  func.func @_attention_kernel_masked(%arg0: i32, %arg1: memref<16x8x32xf32, #tpu.memory_space<vmem>>, %arg2: memref<32x16xf32, #tpu.memory_space<vmem>>, %arg3: memref<1x16xf32, #tpu.memory_space<vmem>>, %arg4: memref<16x8xf32, #tpu.memory_space<vmem>>, %arg5: memref<16x128xf32, #tpu.memory_space<vmem>>, %arg6: memref<16x128xf32, #tpu.memory_space<vmem>>) attributes {dimension_semantics = [#tpu.dimension_semantics<parallel>], iteration_bounds = array<i64: 1>, scalar_prefetch = 0 : i64, scratch_operands = 0 : i64, tpu.core_type = #tpu.core_type<tc>, window_params = [{transform_indices = @transform_0, window_bounds = array<i64: 16, 8, 32>}, {pipeline_mode = #tpu.pipeline_mode<synchronous>, transform_indices = @transform_1, window_bounds = array<i64: 32, 16>}, {pipeline_mode = #tpu.pipeline_mode<synchronous>, transform_indices = @transform_2, window_bounds = array<i64: 1, 16>}, {transform_indices = @transform_3, window_bounds = array<i64: 16, 8>}, {transform_indices = @transform_4, window_bounds = array<i64: 16, 128>}, {transform_indices = @transform_5, window_bounds = array<i64: 16, 128>}]} {
    %c0 = arith.constant 0 : index
    %c0_0 = arith.constant 0 : index
    %c0_1 = arith.constant 0 : index
    %0 = vector.load %arg1[%c0, %c0_0, %c0_1] : memref<16x8x32xf32, #tpu.memory_space<vmem>>, vector<16x8x32xf32>
    %1 = vector.shape_cast %0 : vector<16x8x32xf32> to vector<128x32xf32>
    %c0_2 = arith.constant 0 : index
    %c0_3 = arith.constant 0 : index
    %2 = vector.load %arg2[%c0_2, %c0_3] : memref<32x16xf32, #tpu.memory_space<vmem>>, vector<32x16xf32>
    %cst = arith.constant dense<0.000000e+00> : vector<128x16xf32>
    %3 = tpu.matmul %1, %2, %cst {dimension_numbers = #tpu.dot_dimension_numbers<[1], [0], [0], [1], [0, 0, 1, 1], [], []>} : vector<128x32xf32>, vector<32x16xf32>, vector<128x16xf32> -> vector<128x16xf32>
    %4 = math.tanh %3 : vector<128x16xf32>
    %5 = vector.shape_cast %4 : vector<128x16xf32> to vector<16x8x16xf32>
    %c0_4 = arith.constant 0 : index
    %c0_5 = arith.constant 0 : index
    %6 = vector.load %arg3[%c0_4, %c0_5] : memref<1x16xf32, #tpu.memory_space<vmem>>, vector<1x16xf32>
    %7 = vector.shape_cast %6 : vector<1x16xf32> to vector<1x1x16xf32>
    %8 = vector.broadcast %7 : vector<1x1x16xf32> to vector<16x8x16xf32>
    %9 = arith.mulf %5, %8 : vector<16x8x16xf32>
    %cst_6 = arith.constant dense<0.000000e+00> : vector<16x8xf32>
    %10 = vector.multi_reduction <add>, %9, %cst_6 [2] : vector<16x8x16xf32> to vector<16x8xf32>
    %c0_7 = arith.constant 0 : index
    %c0_8 = arith.constant 0 : index
    %11 = vector.load %arg4[%c0_7, %c0_8] : memref<16x8xf32, #tpu.memory_space<vmem>>, vector<16x8xf32>
    %12 = arith.addf %10, %11 : vector<16x8xf32>
    %cst_9 = arith.constant dense<0xFF800000> : vector<16xf32>
    %13 = vector.multi_reduction <maximumf>, %12, %cst_9 [1] : vector<16x8xf32> to vector<16xf32>
    %14 = vector.shape_cast %13 : vector<16xf32> to vector<16x1xf32>
    %15 = vector.broadcast %14 : vector<16x1xf32> to vector<16x8xf32>
    %16 = arith.subf %12, %15 : vector<16x8xf32>
    %17 = math.exp %16 : vector<16x8xf32>
    %cst_10 = arith.constant dense<0.000000e+00> : vector<16xf32>
    %18 = vector.multi_reduction <add>, %17, %cst_10 [1] : vector<16x8xf32> to vector<16xf32>
    %19 = vector.shape_cast %18 : vector<16xf32> to vector<16x1xf32>
    %20 = vector.broadcast %19 : vector<16x1xf32> to vector<16x8xf32>
    %21 = arith.divf %17, %20 : vector<16x8xf32>
    %22 = vector.shape_cast %21 : vector<16x8xf32> to vector<16x8x1xf32>
    %23 = vector.broadcast %22 : vector<16x8x1xf32> to vector<16x8x32xf32>
    %24 = arith.mulf %23, %0 : vector<16x8x32xf32>
    %cst_11 = arith.constant dense<0.000000e+00> : vector<16x32xf32>
    %25 = vector.multi_reduction <add>, %24, %cst_11 [1] : vector<16x8x32xf32> to vector<16x32xf32>
    %cst_12 = arith.constant 0.000000e+00 : f32
    %26 = vector.broadcast %cst_12 : f32 to vector<16x120xf32>
    %27 = tpu.concatenate %21, %26 in 1 : vector<16x8xf32>, vector<16x120xf32> -> vector<16x128xf32>
    %cst_13 = arith.constant 0.000000e+00 : f32
    %28 = vector.broadcast %cst_13 : f32 to vector<16x96xf32>
    %29 = tpu.concatenate %25, %28 in 1 : vector<16x32xf32>, vector<16x96xf32> -> vector<16x128xf32>
    %c0_14 = arith.constant 0 : index
    %c0_15 = arith.constant 0 : index
    %30 = vector.load %arg6[%c0_14, %c0_15] : memref<16x128xf32, #tpu.memory_space<vmem>>, vector<16x128xf32>
    tpu.vector_store %arg6[%c0_14, %c0_15], %27 {strides = array<i32>} : memref<16x128xf32, #tpu.memory_space<vmem>>, vector<16x128xf32>,
    %c0_16 = arith.constant 0 : index
    %c0_17 = arith.constant 0 : index
    %31 = vector.load %arg5[%c0_16, %c0_17] : memref<16x128xf32, #tpu.memory_space<vmem>>, vector<16x128xf32>
    tpu.vector_store %arg5[%c0_16, %c0_17], %29 {strides = array<i32>} : memref<16x128xf32, #tpu.memory_space<vmem>>, vector<16x128xf32>,
    return
  }
  func.func @transform_0(%arg0: i32) -> (i32, i32, i32) {
    %c0_i32 = arith.constant 0 : i32
    %c0_i32_0 = arith.constant 0 : i32
    %c0_i32_1 = arith.constant 0 : i32
    return %arg0, %c0_i32, %c0_i32_0 : i32, i32, i32
  }
  func.func @transform_1(%arg0: i32) -> (i32, i32) {
    %c0_i32 = arith.constant 0 : i32
    %c0_i32_0 = arith.constant 0 : i32
    %c0_i32_1 = arith.constant 0 : i32
    return %c0_i32, %c0_i32_0 : i32, i32
  }
  func.func @transform_2(%arg0: i32) -> (i32, i32) {
    %c0_i32 = arith.constant 0 : i32
    %c0_i32_0 = arith.constant 0 : i32
    %c0_i32_1 = arith.constant 0 : i32
    return %c0_i32, %c0_i32_0 : i32, i32
  }
  func.func @transform_3(%arg0: i32) -> (i32, i32) {
    %c0_i32 = arith.constant 0 : i32
    %c0_i32_0 = arith.constant 0 : i32
    return %arg0, %c0_i32 : i32, i32
  }
  func.func @transform_4(%arg0: i32) -> (i32, i32) {
    %c0_i32 = arith.constant 0 : i32
    %c0_i32_0 = arith.constant 0 : i32
    return %arg0, %c0_i32 : i32, i32
  }
  func.func @transform_5(%arg0: i32) -> (i32, i32) {
    %c0_i32 = arith.constant 0 : i32
    %c0_i32_0 = arith.constant 0 : i32
    return %arg0, %c0_i32 : i32, i32
  }
}

</mosaic_0001>

<llo_original>
// kernel: tpu_custom_call.1
$region0: #{tpu_custom_call.1}
  #allocation0 [shape = 'u32[]', space=smem, size = 0x4, offset = 0x4, fixed_abs, tag = 'smem constant byte address 0x4 - core index']
  #allocation1 [shape = 'u32[144,128]{1,0:T(1,128)}', space=vmem, size = 0x12000, scoped, tag = 'internal scratch']
  %s0 = inlined_call_operand.hbm [shape: f32[16,8,32], index: 0, kind: input, shape index: {}]
  %s1 = inlined_call_operand.hbm [shape: f32[32,16], index: 1, kind: input, shape index: {}]
  %s2 = inlined_call_operand.hbm [shape: f32[1,16], index: 2, kind: input, shape index: {}]
  %s3 = inlined_call_operand.hbm [shape: f32[16,8], index: 3, kind: input, shape index: {}]
  %s4 = inlined_call_operand.hbm [shape: f32[16,128], index: 4, kind: output, shape index: {0}]
  %s5 = inlined_call_operand.hbm [shape: f32[16,128], index: 5, kind: output, shape index: {1}]
  %6 = xla_tuple %s4, %s5
  %s7 = sld [smem:[#allocation0]]
  $region50: #{tpu_custom_call.1} parent=0
    _
  %s9 = ssub.s32 1, %s7
  %s10 = scalar_select 0, %s9, %s7
  $region1: #{tpu_custom_call.1} parent=0
    #allocation2 [shape = 'u8[65536]{0}', space=vmem, size = 0x10000, scoped, tag = 'input window, operand 0, single buffered']
    #allocation3 [shape = 's32[1]{0}', space=sflag, size = 0x4, scoped, tag = 'scoped memory for tpu_custom_call.1']
    #allocation4 [shape = 's32[1]{0}', space=sflag, size = 0x4, scoped, tag = 'scoped memory for tpu_custom_call.1']
    #allocation5 [shape = 'u8[16384]{0}', space=vmem, size = 0x4000, scoped, tag = 'input window, operand 1, single buffered']
    #allocation6 [shape = 's32[1]{0}', space=sflag, size = 0x4, scoped, tag = 'scoped memory for tpu_custom_call.1']
    #allocation7 [shape = 'u8[512]{0}', space=vmem, size = 0x400, scoped, tag = 'input window, operand 2, single buffered']
    #allocation8 [shape = 'u8[8192]{0}', space=vmem, size = 0x2000, scoped, tag = 'input window, operand 3, single buffered']
    #allocation9 [shape = 's32[1]{0}', space=sflag, size = 0x4, scoped, tag = 'scoped memory for tpu_custom_call.1']
    #allocation10 [shape = 'u8[8192]{0}', space=vmem, size = 0x2000, scoped, tag = 'output window, operand 0, single buffered']
    #allocation11 [shape = 'u8[8192]{0}', space=vmem, size = 0x2000, scoped, tag = 'output window, operand 1, single buffered']
    #allocation12 [shape = 's32[1]{0}', space=sflag, size = 0x4, scoped, tag = 'scoped memory for tpu_custom_call.1']
    %11 = vsyncpa [#allocation3], 0
    %12 = vsyncpa [#allocation6], 0
    %13 = vsyncpa [#allocation9], 0
    %14 = vsyncpa [#allocation4], 0
    %15 = vsyncpa [#allocation12], 0
    // Predicated region
    $region2: #{tpu_custom_call.1} parent=1 // pred_check
      _
    $region3: #{tpu_custom_call.1} parent=1 // pred_check_branch
      %17 = sbr.rel (0) target = $region5
    $region4: #{tpu_custom_call.1} parent=1 // pred_region
      %s19 = ssub.s32 2048, 2048
      %20 = vsyncadd [#allocation3], %s19
      %s21 = sshll.u32 [#allocation2], 4
      %s22 = int_to_ptr.vmem [resolvable:$true] %s21
      %27 = dma.hbm_to_vmem [thread:$0]  %s0, 2048, %s22, [#allocation3], 128, 128, 8
    $region5: #{tpu_custom_call.1} parent=1 // pred_fallthru
      _
    // Predicated region
    $region6: #{tpu_custom_call.1} parent=1 // pred_check
      _
    $region7: #{tpu_custom_call.1} parent=1 // pred_check_branch
      %29 = sbr.rel (0) target = $region9
    $region8: #{tpu_custom_call.1} parent=1 // pred_region
      %s31 = ssub.s32 512, 512
      %32 = vsyncadd [#allocation6], %s31
      %s33 = sshll.u32 [#allocation5], 4
      %s34 = int_to_ptr.vmem [resolvable:$true] %s33
      %39 = dma.hbm_to_vmem [thread:$0]  %s1, 512, %s34, [#allocation6], 128, 128, 8
    $region9: #{tpu_custom_call.1} parent=1 // pred_fallthru
      _
    // Predicated region
    $region10: #{tpu_custom_call.1} parent=1 // pred_check
      _
    $region11: #{tpu_custom_call.1} parent=1 // pred_check_branch
      %41 = sbr.rel (0) target = $region13
    $region12: #{tpu_custom_call.1} parent=1 // pred_region
      %s43 = ssub.s32 16, 16
      %44 = vsyncadd [#allocation6], %s43
      %s46 = sshll.u32 [#allocation7], 4
      %s47 = int_to_ptr.vmem [resolvable:$true] %s46
      %49 = dma.hbm_to_vmem [thread:$0]  %s2, 16, %s47, [#allocation6]
    $region13: #{tpu_custom_call.1} parent=1 // pred_fallthru
      _
    // Predicated region
    $region14: #{tpu_custom_call.1} parent=1 // pred_check
      _
    $region15: #{tpu_custom_call.1} parent=1 // pred_check_branch
      %51 = sbr.rel (0) target = $region17
    $region16: #{tpu_custom_call.1} parent=1 // pred_region
      %s53 = ssub.s32 256, 256
      %54 = vsyncadd [#allocation9], %s53
      %s55 = sshll.u32 [#allocation8], 4
      %s56 = int_to_ptr.vmem [resolvable:$true] %s55
      %61 = dma.hbm_to_vmem [thread:$0]  %s3, 256, %s56, [#allocation9], 128, 128, 8
    $region17: #{tpu_custom_call.1} parent=1 // pred_fallthru
      _
    // Predicated region
    $region18: #{tpu_custom_call.1} parent=1 // pred_check
      _
    $region19: #{tpu_custom_call.1} parent=1 // pred_check_branch
      %63 = sbr.rel (0) target = $region21
    $region20: #{tpu_custom_call.1} parent=1 // pred_region
      %64 = dma.done [#allocation3], 2048
    $region21: #{tpu_custom_call.1} parent=1 // pred_fallthru
      _
    // Predicated region
    $region22: #{tpu_custom_call.1} parent=1 // pred_check
      _
    $region23: #{tpu_custom_call.1} parent=1 // pred_check_branch
      %66 = sbr.rel (0) target = $region25
    $region24: #{tpu_custom_call.1} parent=1 // pred_region
      %67 = dma.done [#allocation6], 512
    $region25: #{tpu_custom_call.1} parent=1 // pred_fallthru
      _
    // Predicated region
    $region26: #{tpu_custom_call.1} parent=1 // pred_check
      _
    $region27: #{tpu_custom_call.1} parent=1 // pred_check_branch
      %69 = sbr.rel (0) target = $region29
    $region28: #{tpu_custom_call.1} parent=1 // pred_region
      %70 = dma.done [#allocation6], 16
    $region29: #{tpu_custom_call.1} parent=1 // pred_fallthru
      _
    // Predicated region
    $region30: #{tpu_custom_call.1} parent=1 // pred_check
      _
    $region31: #{tpu_custom_call.1} parent=1 // pred_check_branch
      %72 = sbr.rel (0) target = $region33
    $region32: #{tpu_custom_call.1} parent=1 // pred_region
      %73 = dma.done [#allocation9], 256
    $region33: #{tpu_custom_call.1} parent=1 // pred_fallthru
      _
    %v74 = vld [vmem:[#allocation2] sm:$0xff]
    %v75 = vld [vmem:[#allocation2 + $0x8] sm:$0xff]
    %v76 = vld [vmem:[#allocation2 + $0x10] sm:$0xff]
    %v77 = vld [vmem:[#allocation2 + $0x18] sm:$0xff]
    %v78 = vld [vmem:[#allocation2 + $0x20] sm:$0xff]
    %v79 = vld [vmem:[#allocation2 + $0x28] sm:$0xff]
    %v80 = vld [vmem:[#allocation2 + $0x30] sm:$0xff]
    %v81 = vld [vmem:[#allocation2 + $0x38] sm:$0xff]
    %v82 = vld [vmem:[#allocation2 + $0x40] sm:$0xff]
    %v83 = vld [vmem:[#allocation2 + $0x48] sm:$0xff]
    %v84 = vld [vmem:[#allocation2 + $0x50] sm:$0xff]
    %v85 = vld [vmem:[#allocation2 + $0x58] sm:$0xff]
    %v86 = vld [vmem:[#allocation2 + $0x60] sm:$0xff]
    %v87 = vld [vmem:[#allocation2 + $0x68] sm:$0xff]
    %v88 = vld [vmem:[#allocation2 + $0x70] sm:$0xff]
    %v89 = vld [vmem:[#allocation2 + $0x78] sm:$0xff]
    %v90 = vld [vmem:[#allocation5] sm:$0xff]
    %v91 = vld [vmem:[#allocation5 + $0x8] sm:$0xff]
    %v92 = vld [vmem:[#allocation5 + $0x10] sm:$0xff]
    %v93 = vld [vmem:[#allocation5 + $0x18] sm:$0xff]
    %vm94 = vcmask 261120
    %v96 = vsel %vm94, %v74, 0
    %v99 = vsel %vm94, %v75, 0
    %v102 = vsel %vm94, %v76, 0
    %v105 = vsel %vm94, %v77, 0
    %v108 = vsel %vm94, %v78, 0
    %v111 = vsel %vm94, %v79, 0
    %v114 = vsel %vm94, %v80, 0
    %v117 = vsel %vm94, %v81, 0
    %v120 = vsel %vm94, %v82, 0
    %v123 = vsel %vm94, %v83, 0
    %v126 = vsel %vm94, %v84, 0
    %v129 = vsel %vm94, %v85, 0
    %v132 = vsel %vm94, %v86, 0
    %v135 = vsel %vm94, %v87, 0
    %v138 = vsel %vm94, %v88, 0
    %v141 = vsel %vm94, %v89, 0
    %143 = vmatprep.subr.mxu0 0.0
    %144 = vmatpush1.msra.mxu0 %v90
    %145 = vmatprep.subr.mxu0 0.0
    %146 = vmatpush1.msra.mxu0 %v91
    %147 = vmatprep.subr.mxu0 0.0
    %148 = vmatpush1.msra.mxu0 %v92
    %149 = vmatprep.subr.mxu0 0.0
    %150 = vmatpush1.msra.mxu0 %v93
    %151 = vmatprep.subr.mxu0 0.0
    %152 = vmatpush1.msra.mxu0 0.0
    %153 = vmatprep.subr.mxu0 0.0
    %154 = vmatpush1.msra.mxu0 0.0
    %155 = vmatprep.subr.mxu0 0.0
    %156 = vmatpush1.msra.mxu0 0.0
    %157 = vmatprep.subr.mxu0 0.0
    %158 = vmatpush1.msra.mxu0 0.0
    %159 = vmatprep.subr.mxu0 0.0
    %160 = vmatpush1.msra.mxu0 0.0
    %161 = vmatprep.subr.mxu0 0.0
    %162 = vmatpush1.msra.mxu0 0.0
    %163 = vmatprep.subr.mxu0 0.0
    %164 = vmatpush1.msra.mxu0 0.0
    %165 = vmatprep.subr.mxu0 0.0
    %166 = vmatpush1.msra.mxu0 0.0
    %167 = vmatprep.subr.mxu0 0.0
    %168 = vmatpush1.msra.mxu0 0.0
    %169 = vmatprep.subr.mxu0 0.0
    %170 = vmatpush1.msra.mxu0 0.0
    %171 = vmatprep.subr.mxu0 0.0
    %172 = vmatpush1.msra.mxu0 0.0
    %173 = vmatprep.subr.mxu0 0.0
    %174 = vmatpush1.msra.mxu0 0.0
    %175 = vmatprep.subr.mxu0 0.0
    %176 = vmatpush1.msra.mxu0 0.0
    %177 = vmatprep.subr.mxu0 0.0
    %178 = vmatpush1.msra.mxu0 0.0
    %179 = vmatprep.subr.mxu0 0.0
    %180 = vmatpush1.msra.mxu0 0.0
    %181 = vmatprep.subr.mxu0 0.0
    %182 = vmatpush1.msra.mxu0 0.0
    %183 = vmatprep.subr.mxu0 0.0
    %184 = vmatpush1.msra.mxu0 0.0
    %185 = vmatprep.subr.mxu0 0.0
    %186 = vmatpush1.msra.mxu0 0.0
    %187 = vmatprep.subr.mxu0 0.0
    %188 = vmatpush1.msra.mxu0 0.0
    %189 = vmatprep.subr.mxu0 0.0
    %190 = vmatpush1.msra.mxu0 0.0
    %191 = vmatprep.subr.mxu0 0.0
    %192 = vmatpush1.msra.mxu0 0.0
    %193 = vmatprep.subr.mxu0 0.0
    %194 = vmatpush1.msra.mxu0 0.0
    %195 = vmatprep.subr.mxu0 0.0
    %196 = vmatpush1.msra.mxu0 0.0
    %197 = vmatprep.subr.mxu0 0.0
    %198 = vmatpush1.msra.mxu0 0.0
    %199 = vmatprep.subr.mxu0 0.0
    %200 = vmatpush1.msra.mxu0 0.0
    %201 = vmatprep.subr.mxu0 0.0
    %202 = vmatpush1.msra.mxu0 0.0
    %203 = vmatprep.subr.mxu0 0.0
    %204 = vmatpush1.msra.mxu0 0.0
    %205 = vmatprep.subr.mxu0 0.0
    %206 = vmatpush1.msra.mxu0 0.0
    %207 = vmatprep.mubr.f32.mxu0 0.0
    %208 = vmatmul.mubr.f32.gmra.mrb[0].mxu0 %v96
    %v209 = vpop.f32.mrb[0].mxu0
    %v210 = vadd.f32 0.0, %v209
    %v211 = vpop.f32.mrb[0].mxu0
    %212 = vmatprep.mubr.f32.mxu0 0.0
    %213 = vmatmul.mubr.f32.gmra.mrb[0].mxu0 %v99
    %v214 = vpop.f32.mrb[0].mxu0
    %v215 = vadd.f32 0.0, %v214
    %v216 = vpop.f32.mrb[0].mxu0
    %217 = vmatprep.mubr.f32.mxu0 0.0
    %218 = vmatmul.mubr.f32.gmra.mrb[0].mxu0 %v102
    %v219 = vpop.f32.mrb[0].mxu0
    %v220 = vadd.f32 0.0, %v219
    %v221 = vpop.f32.mrb[0].mxu0
    %222 = vmatprep.mubr.f32.mxu0 0.0
    %223 = vmatmul.mubr.f32.gmra.mrb[0].mxu0 %v105
    %v224 = vpop.f32.mrb[0].mxu0
    %v225 = vadd.f32 0.0, %v224
    %v226 = vpop.f32.mrb[0].mxu0
    %227 = vmatprep.mubr.f32.mxu0 0.0
    %228 = vmatmul.mubr.f32.gmra.mrb[0].mxu0 %v108
    %v229 = vpop.f32.mrb[0].mxu0
    %v230 = vadd.f32 0.0, %v229
    %v231 = vpop.f32.mrb[0].mxu0
    %232 = vmatprep.mubr.f32.mxu0 0.0
    %233 = vmatmul.mubr.f32.gmra.mrb[0].mxu0 %v111
    %v234 = vpop.f32.mrb[0].mxu0
    %v235 = vadd.f32 0.0, %v234
    %v236 = vpop.f32.mrb[0].mxu0
    %237 = vmatprep.mubr.f32.mxu0 0.0
    %238 = vmatmul.mubr.f32.gmra.mrb[0].mxu0 %v114
    %v239 = vpop.f32.mrb[0].mxu0
    %v240 = vadd.f32 0.0, %v239
    %v241 = vpop.f32.mrb[0].mxu0
    %242 = vmatprep.mubr.f32.mxu0 0.0
    %243 = vmatmul.mubr.f32.gmra.mrb[0].mxu0 %v117
    %v244 = vpop.f32.mrb[0].mxu0
    %v245 = vadd.f32 0.0, %v244
    %v246 = vpop.f32.mrb[0].mxu0
    %247 = vmatprep.mubr.f32.mxu0 0.0
    %248 = vmatmul.mubr.f32.gmra.mrb[0].mxu0 %v120
    %v249 = vpop.f32.mrb[0].mxu0
    %v250 = vadd.f32 0.0, %v249
    %v251 = vpop.f32.mrb[0].mxu0
    %252 = vmatprep.mubr.f32.mxu0 0.0
    %253 = vmatmul.mubr.f32.gmra.mrb[0].mxu0 %v123
    %v254 = vpop.f32.mrb[0].mxu0
    %v255 = vadd.f32 0.0, %v254
    %v256 = vpop.f32.mrb[0].mxu0
    %257 = vmatprep.mubr.f32.mxu0 0.0
    %258 = vmatmul.mubr.f32.gmra.mrb[0].mxu0 %v126
    %v259 = vpop.f32.mrb[0].mxu0
    %v260 = vadd.f32 0.0, %v259
    %v261 = vpop.f32.mrb[0].mxu0
    %262 = vmatprep.mubr.f32.mxu0 0.0
    %263 = vmatmul.mubr.f32.gmra.mrb[0].mxu0 %v129
    %v264 = vpop.f32.mrb[0].mxu0
    %v265 = vadd.f32 0.0, %v264
    %v266 = vpop.f32.mrb[0].mxu0
    %267 = vmatprep.mubr.f32.mxu0 0.0
    %268 = vmatmul.mubr.f32.gmra.mrb[0].mxu0 %v132
    %v269 = vpop.f32.mrb[0].mxu0
    %v270 = vadd.f32 0.0, %v269
    %v271 = vpop.f32.mrb[0].mxu0
    %272 = vmatprep.mubr.f32.mxu0 0.0
    %273 = vmatmul.mubr.f32.gmra.mrb[0].mxu0 %v135
    %v274 = vpop.f32.mrb[0].mxu0
    %v275 = vadd.f32 0.0, %v274
    %v276 = vpop.f32.mrb[0].mxu0
    %277 = vmatprep.mubr.f32.mxu0 0.0
    %278 = vmatmul.mubr.f32.gmra.mrb[0].mxu0 %v138
    %v279 = vpop.f32.mrb[0].mxu0
    %v280 = vadd.f32 0.0, %v279
    %v281 = vpop.f32.mrb[0].mxu0
    %282 = vmatprep.mubr.f32.mxu0 0.0
    %283 = vmatmul.mubr.f32.gmra.mrb[0].mxu0 %v141
    %v284 = vpop.f32.mrb[0].mxu0
    %v285 = vadd.f32 0.0, %v284
    %v286 = vpop.f32.mrb[0].mxu0
    %287 = vdwg.mxu0
    %v288 = vtanh.pop %v210
    %v289 = vtanh.pop %v215
    %v290 = vtanh.pop %v220
    %v291 = vtanh.pop %v225
    %v292 = vtanh.pop %v230
    %v293 = vtanh.pop %v235
    %v294 = vtanh.pop %v240
    %v295 = vtanh.pop %v245
    %v296 = vtanh.pop %v250
    %v297 = vtanh.pop %v255
    %v298 = vtanh.pop %v260
    %v299 = vtanh.pop %v265
    %v300 = vtanh.pop %v270
    %v301 = vtanh.pop %v275
    %v302 = vtanh.pop %v280
    %v303 = vtanh.pop %v285
    %v304 = vld [vmem:[#allocation7] sm:$0x1]
    %v306 = vlaneseq
    %v307 = vshrl.u32 %v306, 7
    %v308 = vsub.s32 0, %v307
    %v309 = vrot.slane %v304, %v308
    %v311 = vmul.f32 %v288, %v309
    %v312 = vmul.f32 %v289, %v309
    %v313 = vmul.f32 %v290, %v309
    %v314 = vmul.f32 %v291, %v309
    %v315 = vmul.f32 %v292, %v309
    %v316 = vmul.f32 %v293, %v309
    %v317 = vmul.f32 %v294, %v309
    %v318 = vmul.f32 %v295, %v309
    %v319 = vmul.f32 %v296, %v309
    %v320 = vmul.f32 %v297, %v309
    %v321 = vmul.f32 %v298, %v309
    %v322 = vmul.f32 %v299, %v309
    %v323 = vmul.f32 %v300, %v309
    %v324 = vmul.f32 %v301, %v309
    %v325 = vmul.f32 %v302, %v309
    %v326 = vmul.f32 %v303, %v309
    %vm327 = vcmask 130048
    %v328 = vsel %vm327, %v311, 0.0
    %329 = vadd.xlane.f32.xlu0 %v328
    %v330 = vpop.xlane.xlu0 %329
    %v331 = vsel %vm327, %v312, 0.0
    %332 = vadd.xlane.f32.xlu0 %v331
    %v333 = vpop.xlane.xlu0 %332
    %v334 = vsel %vm327, %v313, 0.0
    %335 = vadd.xlane.f32.xlu0 %v334
    %v336 = vpop.xlane.xlu0 %335
    %v337 = vsel %vm327, %v314, 0.0
    %338 = vadd.xlane.f32.xlu0 %v337
    %v339 = vpop.xlane.xlu0 %338
    %v340 = vsel %vm327, %v315, 0.0
    %341 = vadd.xlane.f32.xlu0 %v340
    %v342 = vpop.xlane.xlu0 %341
    %v343 = vsel %vm327, %v316, 0.0
    %344 = vadd.xlane.f32.xlu0 %v343
    %v345 = vpop.xlane.xlu0 %344
    %v346 = vsel %vm327, %v317, 0.0
    %347 = vadd.xlane.f32.xlu0 %v346
    %v348 = vpop.xlane.xlu0 %347
    %v349 = vsel %vm327, %v318, 0.0
    %350 = vadd.xlane.f32.xlu0 %v349
    %v351 = vpop.xlane.xlu0 %350
    %v352 = vsel %vm327, %v319, 0.0
    %353 = vadd.xlane.f32.xlu0 %v352
    %v354 = vpop.xlane.xlu0 %353
    %v355 = vsel %vm327, %v320, 0.0
    %356 = vadd.xlane.f32.xlu0 %v355
    %v357 = vpop.xlane.xlu0 %356
    %v358 = vsel %vm327, %v321, 0.0
    %359 = vadd.xlane.f32.xlu0 %v358
    %v360 = vpop.xlane.xlu0 %359
    %v361 = vsel %vm327, %v322, 0.0
    %362 = vadd.xlane.f32.xlu0 %v361
    %v363 = vpop.xlane.xlu0 %362
    %v364 = vsel %vm327, %v323, 0.0
    %365 = vadd.xlane.f32.xlu0 %v364
    %v366 = vpop.xlane.xlu0 %365
    %v367 = vsel %vm327, %v324, 0.0
    %368 = vadd.xlane.f32.xlu0 %v367
    %v369 = vpop.xlane.xlu0 %368
    %v370 = vsel %vm327, %v325, 0.0
    %371 = vadd.xlane.f32.xlu0 %v370
    %v372 = vpop.xlane.xlu0 %371
    %v373 = vsel %vm327, %v326, 0.0
    %374 = vadd.xlane.f32.xlu0 %v373
    %v375 = vpop.xlane.xlu0 %374
    %v376 = vld [vmem:[#allocation8] sm:$0xff]
    %v377 = vld [vmem:[#allocation8 + $0x8] sm:$0xff]
    %v380 = vlaneseq
    %v381 = vshrl.u32 %v380, 7
    %v382 = vsub.s32 0, %v381
    %v383 = vrot.slane %v376, %v382
    %385 = vbcast.lane.b32.xlu0 %v383, 256
    %v386 = vpop.permute.xlu0 %385
    %v387 = vlaneseq
    %v388 = vshrl.u32 %v387, 7
    %v389 = vsub.s32 1, %v388
    %v390 = vrot.slane %v376, %v389
    %392 = vbcast.lane.b32.xlu0 %v390, 256
    %v393 = vpop.permute.xlu0 %392
    %v394 = vlaneseq
    %v395 = vshrl.u32 %v394, 7
    %v396 = vsub.s32 2, %v395
    %v397 = vrot.slane %v376, %v396
    %399 = vbcast.lane.b32.xlu0 %v397, 256
    %v400 = vpop.permute.xlu0 %399
    %v401 = vlaneseq
    %v402 = vshrl.u32 %v401, 7
    %v403 = vsub.s32 3, %v402
    %v404 = vrot.slane %v376, %v403
    %406 = vbcast.lane.b32.xlu0 %v404, 256
    %v407 = vpop.permute.xlu0 %406
    %v408 = vlaneseq
    %v409 = vshrl.u32 %v408, 7
    %v410 = vsub.s32 4, %v409
    %v411 = vrot.slane %v376, %v410
    %413 = vbcast.lane.b32.xlu0 %v411, 256
    %v414 = vpop.permute.xlu0 %413
    %v415 = vlaneseq
    %v416 = vshrl.u32 %v415, 7
    %v417 = vsub.s32 5, %v416
    %v418 = vrot.slane %v376, %v417
    %420 = vbcast.lane.b32.xlu0 %v418, 256
    %v421 = vpop.permute.xlu0 %420
    %v422 = vlaneseq
    %v423 = vshrl.u32 %v422, 7
    %v424 = vsub.s32 6, %v423
    %v425 = vrot.slane %v376, %v424
    %427 = vbcast.lane.b32.xlu0 %v425, 256
    %v428 = vpop.permute.xlu0 %427
    %v429 = vlaneseq
    %v430 = vshrl.u32 %v429, 7
    %v431 = vsub.s32 7, %v430
    %v432 = vrot.slane %v376, %v431
    %434 = vbcast.lane.b32.xlu0 %v432, 256
    %v435 = vpop.permute.xlu0 %434
    %v436 = vlaneseq
    %v437 = vshrl.u32 %v436, 7
    %v438 = vsub.s32 0, %v437
    %v439 = vrot.slane %v377, %v438
    %441 = vbcast.lane.b32.xlu0 %v439, 256
    %v442 = vpop.permute.xlu0 %441
    %v443 = vlaneseq
    %v444 = vshrl.u32 %v443, 7
    %v445 = vsub.s32 1, %v444
    %v446 = vrot.slane %v377, %v445
    %448 = vbcast.lane.b32.xlu0 %v446, 256
    %v449 = vpop.permute.xlu0 %448
    %v450 = vlaneseq
    %v451 = vshrl.u32 %v450, 7
    %v452 = vsub.s32 2, %v451
    %v453 = vrot.slane %v377, %v452
    %455 = vbcast.lane.b32.xlu0 %v453, 256
    %v456 = vpop.permute.xlu0 %455
    %v457 = vlaneseq
    %v458 = vshrl.u32 %v457, 7
    %v459 = vsub.s32 3, %v458
    %v460 = vrot.slane %v377, %v459
    %462 = vbcast.lane.b32.xlu0 %v460, 256
    %v463 = vpop.permute.xlu0 %462
    %v464 = vlaneseq
    %v465 = vshrl.u32 %v464, 7
    %v466 = vsub.s32 4, %v465
    %v467 = vrot.slane %v377, %v466
    %469 = vbcast.lane.b32.xlu0 %v467, 256
    %v470 = vpop.permute.xlu0 %469
    %v471 = vlaneseq
    %v472 = vshrl.u32 %v471, 7
    %v473 = vsub.s32 5, %v472
    %v474 = vrot.slane %v377, %v473
    %476 = vbcast.lane.b32.xlu0 %v474, 256
    %v477 = vpop.permute.xlu0 %476
    %v478 = vlaneseq
    %v479 = vshrl.u32 %v478, 7
    %v480 = vsub.s32 6, %v479
    %v481 = vrot.slane %v377, %v480
    %483 = vbcast.lane.b32.xlu0 %v481, 256
    %v484 = vpop.permute.xlu0 %483
    %v485 = vlaneseq
    %v486 = vshrl.u32 %v485, 7
    %v487 = vsub.s32 7, %v486
    %v488 = vrot.slane %v377, %v487
    %490 = vbcast.lane.b32.xlu0 %v488, 256
    %v491 = vpop.permute.xlu0 %490
    %v508 = vadd.f32 %v330, %v386
    %v509 = vadd.f32 %v333, %v393
    %v510 = vadd.f32 %v336, %v400
    %v511 = vadd.f32 %v339, %v407
    %v512 = vadd.f32 %v342, %v414
    %v513 = vadd.f32 %v345, %v421
    %v514 = vadd.f32 %v348, %v428
    %v515 = vadd.f32 %v351, %v435
    %v516 = vadd.f32 %v354, %v442
    %v517 = vadd.f32 %v357, %v449
    %v518 = vadd.f32 %v360, %v456
    %v519 = vadd.f32 %v363, %v463
    %v520 = vadd.f32 %v366, %v470
    %v521 = vadd.f32 %v369, %v477
    %v522 = vadd.f32 %v372, %v484
    %v523 = vadd.f32 %v375, %v491
    %540 = vset.pattern.permute.xlu0 0
    %541 = vperm.xlu0 %540, %v508
    %v542 = vpop.permute.xlu0 %541
    %543 = vset.pattern.permute.xlu0 0
    %544 = vperm.xlu0 %543, %v509
    %v545 = vpop.permute.xlu0 %544
    %546 = vset.pattern.permute.xlu0 0
    %547 = vperm.xlu0 %546, %v510
    %v548 = vpop.permute.xlu0 %547
    %549 = vset.pattern.permute.xlu0 0
    %550 = vperm.xlu0 %549, %v511
    %v551 = vpop.permute.xlu0 %550
    %552 = vset.pattern.permute.xlu0 0
    %553 = vperm.xlu0 %552, %v512
    %v554 = vpop.permute.xlu0 %553
    %555 = vset.pattern.permute.xlu0 0
    %556 = vperm.xlu0 %555, %v513
    %v557 = vpop.permute.xlu0 %556
    %558 = vset.pattern.permute.xlu0 0
    %559 = vperm.xlu0 %558, %v514
    %v560 = vpop.permute.xlu0 %559
    %561 = vset.pattern.permute.xlu0 0
    %562 = vperm.xlu0 %561, %v515
    %v563 = vpop.permute.xlu0 %562
    %564 = vset.pattern.permute.xlu0 0
    %565 = vperm.xlu0 %564, %v516
    %v566 = vpop.permute.xlu0 %565
    %567 = vset.pattern.permute.xlu0 0
    %568 = vperm.xlu0 %567, %v517
    %v569 = vpop.permute.xlu0 %568
    %570 = vset.pattern.permute.xlu0 0
    %571 = vperm.xlu0 %570, %v518
    %v572 = vpop.permute.xlu0 %571
    %573 = vset.pattern.permute.xlu0 0
    %574 = vperm.xlu0 %573, %v519
    %v575 = vpop.permute.xlu0 %574
    %576 = vset.pattern.permute.xlu0 0
    %577 = vperm.xlu0 %576, %v520
    %v578 = vpop.permute.xlu0 %577
    %579 = vset.pattern.permute.xlu0 0
    %580 = vperm.xlu0 %579, %v521
    %v581 = vpop.permute.xlu0 %580
    %582 = vset.pattern.permute.xlu0 0
    %583 = vperm.xlu0 %582, %v522
    %v584 = vpop.permute.xlu0 %583
    %585 = vset.pattern.permute.xlu0 0
    %586 = vperm.xlu0 %585, %v523
    %v587 = vpop.permute.xlu0 %586
    %v588 = vlaneseq
    %v589 = vand.u32 %v588, 127
    %v590 = vlaneseq
    %v591 = vshrl.u32 %v590, 7
    %v592 = vsub.s32 %v589, %v591
    %v593 = vrot.slane %v542, %v592
    %v594 = vlaneseq
    %v595 = vshrl.u32 %v594, 7
    %v596 = vsub.s32 %v589, %v595
    %v597 = vrot.slane %v545, %v596
    %v598 = vlaneseq
    %v599 = vshrl.u32 %v598, 7
    %v600 = vsub.s32 %v589, %v599
    %v601 = vrot.slane %v548, %v600
    %v602 = vlaneseq
    %v603 = vshrl.u32 %v602, 7
    %v604 = vsub.s32 %v589, %v603
    %v605 = vrot.slane %v551, %v604
    %v606 = vlaneseq
    %v607 = vshrl.u32 %v606, 7
    %v608 = vsub.s32 %v589, %v607
    %v609 = vrot.slane %v554, %v608
    %v610 = vlaneseq
    %v611 = vshrl.u32 %v610, 7
    %v612 = vsub.s32 %v589, %v611
    %v613 = vrot.slane %v557, %v612
    %v614 = vlaneseq
    %v615 = vshrl.u32 %v614, 7
    %v616 = vsub.s32 %v589, %v615
    %v617 = vrot.slane %v560, %v616
    %v618 = vlaneseq
    %v619 = vshrl.u32 %v618, 7
    %v620 = vsub.s32 %v589, %v619
    %v621 = vrot.slane %v563, %v620
    %v622 = vlaneseq
    %v623 = vshrl.u32 %v622, 7
    %v624 = vsub.s32 %v589, %v623
    %v625 = vrot.slane %v566, %v624
    %v626 = vlaneseq
    %v627 = vshrl.u32 %v626, 7
    %v628 = vsub.s32 %v589, %v627
    %v629 = vrot.slane %v569, %v628
    %v630 = vlaneseq
    %v631 = vshrl.u32 %v630, 7
    %v632 = vsub.s32 %v589, %v631
    %v633 = vrot.slane %v572, %v632
    %v634 = vlaneseq
    %v635 = vshrl.u32 %v634, 7
    %v636 = vsub.s32 %v589, %v635
    %v637 = vrot.slane %v575, %v636
    %v638 = vlaneseq
    %v639 = vshrl.u32 %v638, 7
    %v640 = vsub.s32 %v589, %v639
    %v641 = vrot.slane %v578, %v640
    %v642 = vlaneseq
    %v643 = vshrl.u32 %v642, 7
    %v644 = vsub.s32 %v589, %v643
    %v645 = vrot.slane %v581, %v644
    %v646 = vlaneseq
    %v647 = vshrl.u32 %v646, 7
    %v648 = vsub.s32 %v589, %v647
    %v649 = vrot.slane %v584, %v648
    %v650 = vlaneseq
    %v651 = vshrl.u32 %v650, 7
    %v652 = vsub.s32 %v589, %v651
    %v653 = vrot.slane %v587, %v652
    %vm654 = vcmask 1041409
    %v655 = vsel %vm654, %v597, %v593
    %vm656 = vcmask 1042434
    %v657 = vsel %vm656, %v601, %v655
    %vm658 = vcmask 1043459
    %v659 = vsel %vm658, %v605, %v657
    %vm660 = vcmask 1044484
    %v661 = vsel %vm660, %v609, %v659
    %vm662 = vcmask 1045509
    %v663 = vsel %vm662, %v613, %v661
    %vm664 = vcmask 1046534
    %v665 = vsel %vm664, %v617, %v663
    %vm666 = vcmask 1047559
    %v667 = vsel %vm666, %v621, %v665
    %v668 = vsel %vm654, %v629, %v625
    %v669 = vsel %vm656, %v633, %v668
    %v670 = vsel %vm658, %v637, %v669
    %v671 = vsel %vm660, %v641, %v670
    %v672 = vsel %vm662, %v645, %v671
    %v673 = vsel %vm664, %v649, %v672
    %v674 = vsel %vm666, %v653, %v673
    %vm677 = vcmask 64512
    %v678 = vsel %vm677, %v667, -inf
    %679 = vmax.xlane.f32.xlu0 %v678
    %v680 = vpop.xlane.xlu0 %679
    %v681 = vsel %vm677, %v674, -inf
    %682 = vmax.xlane.f32.xlu0 %v681
    %v683 = vpop.xlane.xlu0 %682
    %v686 = vlaneseq
    %v687 = vshrl.u32 %v686, 7
    %v688 = vsub.s32 0, %v687
    %v689 = vrot.slane %v680, %v688
    %v690 = vlaneseq
    %v691 = vshrl.u32 %v690, 7
    %v692 = vsub.s32 1, %v691
    %v693 = vrot.slane %v680, %v692
    %v694 = vlaneseq
    %v695 = vshrl.u32 %v694, 7
    %v696 = vsub.s32 2, %v695
    %v697 = vrot.slane %v680, %v696
    %v698 = vlaneseq
    %v699 = vshrl.u32 %v698, 7
    %v700 = vsub.s32 3, %v699
    %v701 = vrot.slane %v680, %v700
    %v702 = vlaneseq
    %v703 = vshrl.u32 %v702, 7
    %v704 = vsub.s32 4, %v703
    %v705 = vrot.slane %v680, %v704
    %v706 = vlaneseq
    %v707 = vshrl.u32 %v706, 7
    %v708 = vsub.s32 5, %v707
    %v709 = vrot.slane %v680, %v708
    %v710 = vlaneseq
    %v711 = vshrl.u32 %v710, 7
    %v712 = vsub.s32 6, %v711
    %v713 = vrot.slane %v680, %v712
    %v714 = vlaneseq
    %v715 = vshrl.u32 %v714, 7
    %v716 = vsub.s32 7, %v715
    %v717 = vrot.slane %v680, %v716
    %v718 = vlaneseq
    %v719 = vshrl.u32 %v718, 7
    %v720 = vsub.s32 0, %v719
    %v721 = vrot.slane %v683, %v720
    %v722 = vlaneseq
    %v723 = vshrl.u32 %v722, 7
    %v724 = vsub.s32 1, %v723
    %v725 = vrot.slane %v683, %v724
    %v726 = vlaneseq
    %v727 = vshrl.u32 %v726, 7
    %v728 = vsub.s32 2, %v727
    %v729 = vrot.slane %v683, %v728
    %v730 = vlaneseq
    %v731 = vshrl.u32 %v730, 7
    %v732 = vsub.s32 3, %v731
    %v733 = vrot.slane %v683, %v732
    %v734 = vlaneseq
    %v735 = vshrl.u32 %v734, 7
    %v736 = vsub.s32 4, %v735
    %v737 = vrot.slane %v683, %v736
    %v738 = vlaneseq
    %v739 = vshrl.u32 %v738, 7
    %v740 = vsub.s32 5, %v739
    %v741 = vrot.slane %v683, %v740
    %v742 = vlaneseq
    %v743 = vshrl.u32 %v742, 7
    %v744 = vsub.s32 6, %v743
    %v745 = vrot.slane %v683, %v744
    %v746 = vlaneseq
    %v747 = vshrl.u32 %v746, 7
    %v748 = vsub.s32 7, %v747
    %v749 = vrot.slane %v683, %v748
    %v766 = vsub.f32 %v508, %v689
    %v767 = vsub.f32 %v509, %v693
    %v768 = vsub.f32 %v510, %v697
    %v769 = vsub.f32 %v511, %v701
    %v770 = vsub.f32 %v512, %v705
    %v771 = vsub.f32 %v513, %v709
    %v772 = vsub.f32 %v514, %v713
    %v773 = vsub.f32 %v515, %v717
    %v774 = vsub.f32 %v516, %v721
    %v775 = vsub.f32 %v517, %v725
    %v776 = vsub.f32 %v518, %v729
    %v777 = vsub.f32 %v519, %v733
    %v778 = vsub.f32 %v520, %v737
    %v779 = vsub.f32 %v521, %v741
    %v780 = vsub.f32 %v522, %v745
    %v781 = vsub.f32 %v523, %v749
    %v782 = vmul.f32 %v766, 1.442695
    %v783 = vpow.pop %v782
    %v784 = vmul.f32 %v767, 1.442695
    %v785 = vpow.pop %v784
    %v786 = vmul.f32 %v768, 1.442695
    %v787 = vpow.pop %v786
    %v788 = vmul.f32 %v769, 1.442695
    %v789 = vpow.pop %v788
    %v790 = vmul.f32 %v770, 1.442695
    %v791 = vpow.pop %v790
    %v792 = vmul.f32 %v771, 1.442695
    %v793 = vpow.pop %v792
    %v794 = vmul.f32 %v772, 1.442695
    %v795 = vpow.pop %v794
    %v796 = vmul.f32 %v773, 1.442695
    %v797 = vpow.pop %v796
    %v798 = vmul.f32 %v774, 1.442695
    %v799 = vpow.pop %v798
    %v800 = vmul.f32 %v775, 1.442695
    %v801 = vpow.pop %v800
    %v802 = vmul.f32 %v776, 1.442695
    %v803 = vpow.pop %v802
    %v804 = vmul.f32 %v777, 1.442695
    %v805 = vpow.pop %v804
    %v806 = vmul.f32 %v778, 1.442695
    %v807 = vpow.pop %v806
    %v808 = vmul.f32 %v779, 1.442695
    %v809 = vpow.pop %v808
    %v810 = vmul.f32 %v780, 1.442695
    %v811 = vpow.pop %v810
    %v812 = vmul.f32 %v781, 1.442695
    %v813 = vpow.pop %v812
    %830 = vset.pattern.permute.xlu0 0
    %831 = vperm.xlu0 %830, %v783
    %v832 = vpop.permute.xlu0 %831
    %833 = vset.pattern.permute.xlu0 0
    %834 = vperm.xlu0 %833, %v785
    %v835 = vpop.permute.xlu0 %834
    %836 = vset.pattern.permute.xlu0 0
    %837 = vperm.xlu0 %836, %v787
    %v838 = vpop.permute.xlu0 %837
    %839 = vset.pattern.permute.xlu0 0
    %840 = vperm.xlu0 %839, %v789
    %v841 = vpop.permute.xlu0 %840
    %842 = vset.pattern.permute.xlu0 0
    %843 = vperm.xlu0 %842, %v791
    %v844 = vpop.permute.xlu0 %843
    %845 = vset.pattern.permute.xlu0 0
    %846 = vperm.xlu0 %845, %v793
    %v847 = vpop.permute.xlu0 %846
    %848 = vset.pattern.permute.xlu0 0
    %849 = vperm.xlu0 %848, %v795
    %v850 = vpop.permute.xlu0 %849
    %851 = vset.pattern.permute.xlu0 0
    %852 = vperm.xlu0 %851, %v797
    %v853 = vpop.permute.xlu0 %852
    %854 = vset.pattern.permute.xlu0 0
    %855 = vperm.xlu0 %854, %v799
    %v856 = vpop.permute.xlu0 %855
    %857 = vset.pattern.permute.xlu0 0
    %858 = vperm.xlu0 %857, %v801
    %v859 = vpop.permute.xlu0 %858
    %860 = vset.pattern.permute.xlu0 0
    %861 = vperm.xlu0 %860, %v803
    %v862 = vpop.permute.xlu0 %861
    %863 = vset.pattern.permute.xlu0 0
    %864 = vperm.xlu0 %863, %v805
    %v865 = vpop.permute.xlu0 %864
    %866 = vset.pattern.permute.xlu0 0
    %867 = vperm.xlu0 %866, %v807
    %v868 = vpop.permute.xlu0 %867
    %869 = vset.pattern.permute.xlu0 0
    %870 = vperm.xlu0 %869, %v809
    %v871 = vpop.permute.xlu0 %870
    %872 = vset.pattern.permute.xlu0 0
    %873 = vperm.xlu0 %872, %v811
    %v874 = vpop.permute.xlu0 %873
    %875 = vset.pattern.permute.xlu0 0
    %876 = vperm.xlu0 %875, %v813
    %v877 = vpop.permute.xlu0 %876
    %v878 = vlaneseq
    %v879 = vshrl.u32 %v878, 7
    %v880 = vsub.s32 %v589, %v879
    %v881 = vrot.slane %v832, %v880
    %v882 = vlaneseq
    %v883 = vshrl.u32 %v882, 7
    %v884 = vsub.s32 %v589, %v883
    %v885 = vrot.slane %v835, %v884
    %v886 = vlaneseq
    %v887 = vshrl.u32 %v886, 7
    %v888 = vsub.s32 %v589, %v887
    %v889 = vrot.slane %v838, %v888
    %v890 = vlaneseq
    %v891 = vshrl.u32 %v890, 7
    %v892 = vsub.s32 %v589, %v891
    %v893 = vrot.slane %v841, %v892
    %v894 = vlaneseq
    %v895 = vshrl.u32 %v894, 7
    %v896 = vsub.s32 %v589, %v895
    %v897 = vrot.slane %v844, %v896
    %v898 = vlaneseq
    %v899 = vshrl.u32 %v898, 7
    %v900 = vsub.s32 %v589, %v899
    %v901 = vrot.slane %v847, %v900
    %v902 = vlaneseq
    %v903 = vshrl.u32 %v902, 7
    %v904 = vsub.s32 %v589, %v903
    %v905 = vrot.slane %v850, %v904
    %v906 = vlaneseq
    %v907 = vshrl.u32 %v906, 7
    %v908 = vsub.s32 %v589, %v907
    %v909 = vrot.slane %v853, %v908
    %v910 = vlaneseq
    %v911 = vshrl.u32 %v910, 7
    %v912 = vsub.s32 %v589, %v911
    %v913 = vrot.slane %v856, %v912
    %v914 = vlaneseq
    %v915 = vshrl.u32 %v914, 7
    %v916 = vsub.s32 %v589, %v915
    %v917 = vrot.slane %v859, %v916
    %v918 = vlaneseq
    %v919 = vshrl.u32 %v918, 7
    %v920 = vsub.s32 %v589, %v919
    %v921 = vrot.slane %v862, %v920
    %v922 = vlaneseq
    %v923 = vshrl.u32 %v922, 7
    %v924 = vsub.s32 %v589, %v923
    %v925 = vrot.slane %v865, %v924
    %v926 = vlaneseq
    %v927 = vshrl.u32 %v926, 7
    %v928 = vsub.s32 %v589, %v927
    %v929 = vrot.slane %v868, %v928
    %v930 = vlaneseq
    %v931 = vshrl.u32 %v930, 7
    %v932 = vsub.s32 %v589, %v931
    %v933 = vrot.slane %v871, %v932
    %v934 = vlaneseq
    %v935 = vshrl.u32 %v934, 7
    %v936 = vsub.s32 %v589, %v935
    %v937 = vrot.slane %v874, %v936
    %v938 = vlaneseq
    %v939 = vshrl.u32 %v938, 7
    %v940 = vsub.s32 %v589, %v939
    %v941 = vrot.slane %v877, %v940
    %v942 = vsel %vm654, %v885, %v881
    %v943 = vsel %vm656, %v889, %v942
    %v944 = vsel %vm658, %v893, %v943
    %v945 = vsel %vm660, %v897, %v944
    %v946 = vsel %vm662, %v901, %v945
    %v947 = vsel %vm664, %v905, %v946
    %v948 = vsel %vm666, %v909, %v947
    %v949 = vsel %vm654, %v917, %v913
    %v950 = vsel %vm656, %v921, %v949
    %v951 = vsel %vm658, %v925, %v950
    %v952 = vsel %vm660, %v929, %v951
    %v953 = vsel %vm662, %v933, %v952
    %v954 = vsel %vm664, %v937, %v953
    %v955 = vsel %vm666, %v941, %v954
    %v958 = vsel %vm677, %v948, 0.0
    %959 = vadd.xlane.f32.xlu0 %v958
    %v960 = vpop.xlane.xlu0 %959
    %v961 = vsel %vm677, %v955, 0.0
    %962 = vadd.xlane.f32.xlu0 %v961
    %v963 = vpop.xlane.xlu0 %962
    %v966 = vlaneseq
    %v967 = vshrl.u32 %v966, 7
    %v968 = vsub.s32 0, %v967
    %v969 = vrot.slane %v960, %v968
    %v970 = vlaneseq
    %v971 = vshrl.u32 %v970, 7
    %v972 = vsub.s32 1, %v971
    %v973 = vrot.slane %v960, %v972
    %v974 = vlaneseq
    %v975 = vshrl.u32 %v974, 7
    %v976 = vsub.s32 2, %v975
    %v977 = vrot.slane %v960, %v976
    %v978 = vlaneseq
    %v979 = vshrl.u32 %v978, 7
    %v980 = vsub.s32 3, %v979
    %v981 = vrot.slane %v960, %v980
    %v982 = vlaneseq
    %v983 = vshrl.u32 %v982, 7
    %v984 = vsub.s32 4, %v983
    %v985 = vrot.slane %v960, %v984
    %v986 = vlaneseq
    %v987 = vshrl.u32 %v986, 7
    %v988 = vsub.s32 5, %v987
    %v989 = vrot.slane %v960, %v988
    %v990 = vlaneseq
    %v991 = vshrl.u32 %v990, 7
    %v992 = vsub.s32 6, %v991
    %v993 = vrot.slane %v960, %v992
    %v994 = vlaneseq
    %v995 = vshrl.u32 %v994, 7
    %v996 = vsub.s32 7, %v995
    %v997 = vrot.slane %v960, %v996
    %v998 = vlaneseq
    %v999 = vshrl.u32 %v998, 7
    %v1000 = vsub.s32 0, %v999
    %v1001 = vrot.slane %v963, %v1000
    %v1002 = vlaneseq
    %v1003 = vshrl.u32 %v1002, 7
    %v1004 = vsub.s32 1, %v1003
    %v1005 = vrot.slane %v963, %v1004
    %v1006 = vlaneseq
    %v1007 = vshrl.u32 %v1006, 7
    %v1008 = vsub.s32 2, %v1007
    %v1009 = vrot.slane %v963, %v1008
    %v1010 = vlaneseq
    %v1011 = vshrl.u32 %v1010, 7
    %v1012 = vsub.s32 3, %v1011
    %v1013 = vrot.slane %v963, %v1012
    %v1014 = vlaneseq
    %v1015 = vshrl.u32 %v1014, 7
    %v1016 = vsub.s32 4, %v1015
    %v1017 = vrot.slane %v963, %v1016
    %v1018 = vlaneseq
    %v1019 = vshrl.u32 %v1018, 7
    %v1020 = vsub.s32 5, %v1019
    %v1021 = vrot.slane %v963, %v1020
    %v1022 = vlaneseq
    %v1023 = vshrl.u32 %v1022, 7
    %v1024 = vsub.s32 6, %v1023
    %v1025 = vrot.slane %v963, %v1024
    %v1026 = vlaneseq
    %v1027 = vshrl.u32 %v1026, 7
    %v1028 = vsub.s32 7, %v1027
    %v1029 = vrot.slane %v963, %v1028
    %v1046 = vrcp.pop %v969
    %v1047 = vmul.f32 %v783, %v1046
    %v1048 = vrcp.pop %v973
    %v1049 = vmul.f32 %v785, %v1048
    %v1050 = vrcp.pop %v977
    %v1051 = vmul.f32 %v787, %v1050
    %v1052 = vrcp.pop %v981
    %v1053 = vmul.f32 %v789, %v1052
    %v1054 = vrcp.pop %v985
    %v1055 = vmul.f32 %v791, %v1054
    %v1056 = vrcp.pop %v989
    %v1057 = vmul.f32 %v793, %v1056
    %v1058 = vrcp.pop %v993
    %v1059 = vmul.f32 %v795, %v1058
    %v1060 = vrcp.pop %v997
    %v1061 = vmul.f32 %v797, %v1060
    %v1062 = vrcp.pop %v1001
    %v1063 = vmul.f32 %v799, %v1062
    %v1064 = vrcp.pop %v1005
    %v1065 = vmul.f32 %v801, %v1064
    %v1066 = vrcp.pop %v1009
    %v1067 = vmul.f32 %v803, %v1066
    %v1068 = vrcp.pop %v1013
    %v1069 = vmul.f32 %v805, %v1068
    %v1070 = vrcp.pop %v1017
    %v1071 = vmul.f32 %v807, %v1070
    %v1072 = vrcp.pop %v1021
    %v1073 = vmul.f32 %v809, %v1072
    %v1074 = vrcp.pop %v1025
    %v1075 = vmul.f32 %v811, %v1074
    %v1076 = vrcp.pop %v1029
    %v1077 = vmul.f32 %v813, %v1076
    %1079 = vset.pattern.permute.xlu0 0
    %1080 = vperm.xlu0 %1079, %v1047
    %v1081 = vpop.permute.xlu0 %1080
    %1084 = vset.pattern.permute.xlu0 0
    %1085 = vperm.xlu0 %1084, %v1049
    %v1086 = vpop.permute.xlu0 %1085
    %1089 = vset.pattern.permute.xlu0 0
    %1090 = vperm.xlu0 %1089, %v1051
    %v1091 = vpop.permute.xlu0 %1090
    %1094 = vset.pattern.permute.xlu0 0
    %1095 = vperm.xlu0 %1094, %v1053
    %v1096 = vpop.permute.xlu0 %1095
    %1099 = vset.pattern.permute.xlu0 0
    %1100 = vperm.xlu0 %1099, %v1055
    %v1101 = vpop.permute.xlu0 %1100
    %1104 = vset.pattern.permute.xlu0 0
    %1105 = vperm.xlu0 %1104, %v1057
    %v1106 = vpop.permute.xlu0 %1105
    %1109 = vset.pattern.permute.xlu0 0
    %1110 = vperm.xlu0 %1109, %v1059
    %v1111 = vpop.permute.xlu0 %1110
    %1114 = vset.pattern.permute.xlu0 0
    %1115 = vperm.xlu0 %1114, %v1061
    %v1116 = vpop.permute.xlu0 %1115
    %1119 = vset.pattern.permute.xlu0 0
    %1120 = vperm.xlu0 %1119, %v1063
    %v1121 = vpop.permute.xlu0 %1120
    %1124 = vset.pattern.permute.xlu0 0
    %1125 = vperm.xlu0 %1124, %v1065
    %v1126 = vpop.permute.xlu0 %1125
    %1129 = vset.pattern.permute.xlu0 0
    %1130 = vperm.xlu0 %1129, %v1067
    %v1131 = vpop.permute.xlu0 %1130
    %1134 = vset.pattern.permute.xlu0 0
    %1135 = vperm.xlu0 %1134, %v1069
    %v1136 = vpop.permute.xlu0 %1135
    %1139 = vset.pattern.permute.xlu0 0
    %1140 = vperm.xlu0 %1139, %v1071
    %v1141 = vpop.permute.xlu0 %1140
    %1144 = vset.pattern.permute.xlu0 0
    %1145 = vperm.xlu0 %1144, %v1073
    %v1146 = vpop.permute.xlu0 %1145
    %1149 = vset.pattern.permute.xlu0 0
    %1150 = vperm.xlu0 %1149, %v1075
    %v1151 = vpop.permute.xlu0 %1150
    %1154 = vset.pattern.permute.xlu0 0
    %1155 = vperm.xlu0 %1154, %v1077
    %v1156 = vpop.permute.xlu0 %1155
    %v1158 = vmul.f32 %v1081, %v74
    %v1159 = vmul.f32 %v1086, %v75
    %v1160 = vmul.f32 %v1091, %v76
    %v1161 = vmul.f32 %v1096, %v77
    %v1162 = vmul.f32 %v1101, %v78
    %v1163 = vmul.f32 %v1106, %v79
    %v1164 = vmul.f32 %v1111, %v80
    %v1165 = vmul.f32 %v1116, %v81
    %v1166 = vmul.f32 %v1121, %v82
    %v1167 = vmul.f32 %v1126, %v83
    %v1168 = vmul.f32 %v1131, %v84
    %v1169 = vmul.f32 %v1136, %v85
    %v1170 = vmul.f32 %v1141, %v86
    %v1171 = vmul.f32 %v1146, %v87
    %v1172 = vmul.f32 %v1151, %v88
    %v1173 = vmul.f32 %v1156, %v89
    %v1174 = vsel %vm94, %v1158, 0.0
    %v1175 = vrot.slane %v1174, 4
    %v1176 = vadd.f32 %v1174, %v1175
    %v1177 = vrot.slane %v1176, 2
    %v1178 = vadd.f32 %v1176, %v1177
    %v1179 = vrot.slane %v1178, 1
    %v1180 = vadd.f32 %v1178, %v1179
    %v1181 = vsel %vm94, %v1159, 0.0
    %v1182 = vrot.slane %v1181, 4
    %v1183 = vadd.f32 %v1181, %v1182
    %v1184 = vrot.slane %v1183, 2
    %v1185 = vadd.f32 %v1183, %v1184
    %v1186 = vrot.slane %v1185, 1
    %v1187 = vadd.f32 %v1185, %v1186
    %v1188 = vsel %vm94, %v1160, 0.0
    %v1189 = vrot.slane %v1188, 4
    %v1190 = vadd.f32 %v1188, %v1189
    %v1191 = vrot.slane %v1190, 2
    %v1192 = vadd.f32 %v1190, %v1191
    %v1193 = vrot.slane %v1192, 1
    %v1194 = vadd.f32 %v1192, %v1193
    %v1195 = vsel %vm94, %v1161, 0.0
    %v1196 = vrot.slane %v1195, 4
    %v1197 = vadd.f32 %v1195, %v1196
    %v1198 = vrot.slane %v1197, 2
    %v1199 = vadd.f32 %v1197, %v1198
    %v1200 = vrot.slane %v1199, 1
    %v1201 = vadd.f32 %v1199, %v1200
    %v1202 = vsel %vm94, %v1162, 0.0
    %v1203 = vrot.slane %v1202, 4
    %v1204 = vadd.f32 %v1202, %v1203
    %v1205 = vrot.slane %v1204, 2
    %v1206 = vadd.f32 %v1204, %v1205
    %v1207 = vrot.slane %v1206, 1
    %v1208 = vadd.f32 %v1206, %v1207
    %v1209 = vsel %vm94, %v1163, 0.0
    %v1210 = vrot.slane %v1209, 4
    %v1211 = vadd.f32 %v1209, %v1210
    %v1212 = vrot.slane %v1211, 2
    %v1213 = vadd.f32 %v1211, %v1212
    %v1214 = vrot.slane %v1213, 1
    %v1215 = vadd.f32 %v1213, %v1214
    %v1216 = vsel %vm94, %v1164, 0.0
    %v1217 = vrot.slane %v1216, 4
    %v1218 = vadd.f32 %v1216, %v1217
    %v1219 = vrot.slane %v1218, 2
    %v1220 = vadd.f32 %v1218, %v1219
    %v1221 = vrot.slane %v1220, 1
    %v1222 = vadd.f32 %v1220, %v1221
    %v1223 = vsel %vm94, %v1165, 0.0
    %v1224 = vrot.slane %v1223, 4
    %v1225 = vadd.f32 %v1223, %v1224
    %v1226 = vrot.slane %v1225, 2
    %v1227 = vadd.f32 %v1225, %v1226
    %v1228 = vrot.slane %v1227, 1
    %v1229 = vadd.f32 %v1227, %v1228
    %v1230 = vsel %vm94, %v1166, 0.0
    %v1231 = vrot.slane %v1230, 4
    %v1232 = vadd.f32 %v1230, %v1231
    %v1233 = vrot.slane %v1232, 2
    %v1234 = vadd.f32 %v1232, %v1233
    %v1235 = vrot.slane %v1234, 1
    %v1236 = vadd.f32 %v1234, %v1235
    %v1237 = vsel %vm94, %v1167, 0.0
    %v1238 = vrot.slane %v1237, 4
    %v1239 = vadd.f32 %v1237, %v1238
    %v1240 = vrot.slane %v1239, 2
    %v1241 = vadd.f32 %v1239, %v1240
    %v1242 = vrot.slane %v1241, 1
    %v1243 = vadd.f32 %v1241, %v1242
    %v1244 = vsel %vm94, %v1168, 0.0
    %v1245 = vrot.slane %v1244, 4
    %v1246 = vadd.f32 %v1244, %v1245
    %v1247 = vrot.slane %v1246, 2
    %v1248 = vadd.f32 %v1246, %v1247
    %v1249 = vrot.slane %v1248, 1
    %v1250 = vadd.f32 %v1248, %v1249
    %v1251 = vsel %vm94, %v1169, 0.0
    %v1252 = vrot.slane %v1251, 4
    %v1253 = vadd.f32 %v1251, %v1252
    %v1254 = vrot.slane %v1253, 2
    %v1255 = vadd.f32 %v1253, %v1254
    %v1256 = vrot.slane %v1255, 1
    %v1257 = vadd.f32 %v1255, %v1256
    %v1258 = vsel %vm94, %v1170, 0.0
    %v1259 = vrot.slane %v1258, 4
    %v1260 = vadd.f32 %v1258, %v1259
    %v1261 = vrot.slane %v1260, 2
    %v1262 = vadd.f32 %v1260, %v1261
    %v1263 = vrot.slane %v1262, 1
    %v1264 = vadd.f32 %v1262, %v1263
    %v1265 = vsel %vm94, %v1171, 0.0
    %v1266 = vrot.slane %v1265, 4
    %v1267 = vadd.f32 %v1265, %v1266
    %v1268 = vrot.slane %v1267, 2
    %v1269 = vadd.f32 %v1267, %v1268
    %v1270 = vrot.slane %v1269, 1
    %v1271 = vadd.f32 %v1269, %v1270
    %v1272 = vsel %vm94, %v1172, 0.0
    %v1273 = vrot.slane %v1272, 4
    %v1274 = vadd.f32 %v1272, %v1273
    %v1275 = vrot.slane %v1274, 2
    %v1276 = vadd.f32 %v1274, %v1275
    %v1277 = vrot.slane %v1276, 1
    %v1278 = vadd.f32 %v1276, %v1277
    %v1279 = vsel %vm94, %v1173, 0.0
    %v1280 = vrot.slane %v1279, 4
    %v1281 = vadd.f32 %v1279, %v1280
    %v1282 = vrot.slane %v1281, 2
    %v1283 = vadd.f32 %v1281, %v1282
    %v1284 = vrot.slane %v1283, 1
    %v1285 = vadd.f32 %v1283, %v1284
    %v1286 = vlaneseq
    %v1287 = vshrl.u32 %v1286, 7
    %v1288 = vsub.s32 %v589, %v1287
    %v1289 = vrot.slane %v1081, %v1288
    %v1290 = vlaneseq
    %v1291 = vshrl.u32 %v1290, 7
    %v1292 = vsub.s32 %v589, %v1291
    %v1293 = vrot.slane %v1086, %v1292
    %v1294 = vlaneseq
    %v1295 = vshrl.u32 %v1294, 7
    %v1296 = vsub.s32 %v589, %v1295
    %v1297 = vrot.slane %v1091, %v1296
    %v1298 = vlaneseq
    %v1299 = vshrl.u32 %v1298, 7
    %v1300 = vsub.s32 %v589, %v1299
    %v1301 = vrot.slane %v1096, %v1300
    %v1302 = vlaneseq
    %v1303 = vshrl.u32 %v1302, 7
    %v1304 = vsub.s32 %v589, %v1303
    %v1305 = vrot.slane %v1101, %v1304
    %v1306 = vlaneseq
    %v1307 = vshrl.u32 %v1306, 7
    %v1308 = vsub.s32 %v589, %v1307
    %v1309 = vrot.slane %v1106, %v1308
    %v1310 = vlaneseq
    %v1311 = vshrl.u32 %v1310, 7
    %v1312 = vsub.s32 %v589, %v1311
    %v1313 = vrot.slane %v1111, %v1312
    %v1314 = vlaneseq
    %v1315 = vshrl.u32 %v1314, 7
    %v1316 = vsub.s32 %v589, %v1315
    %v1317 = vrot.slane %v1116, %v1316
    %v1318 = vlaneseq
    %v1319 = vshrl.u32 %v1318, 7
    %v1320 = vsub.s32 %v589, %v1319
    %v1321 = vrot.slane %v1121, %v1320
    %v1322 = vlaneseq
    %v1323 = vshrl.u32 %v1322, 7
    %v1324 = vsub.s32 %v589, %v1323
    %v1325 = vrot.slane %v1126, %v1324
    %v1326 = vlaneseq
    %v1327 = vshrl.u32 %v1326, 7
    %v1328 = vsub.s32 %v589, %v1327
    %v1329 = vrot.slane %v1131, %v1328
    %v1330 = vlaneseq
    %v1331 = vshrl.u32 %v1330, 7
    %v1332 = vsub.s32 %v589, %v1331
    %v1333 = vrot.slane %v1136, %v1332
    %v1334 = vlaneseq
    %v1335 = vshrl.u32 %v1334, 7
    %v1336 = vsub.s32 %v589, %v1335
    %v1337 = vrot.slane %v1141, %v1336
    %v1338 = vlaneseq
    %v1339 = vshrl.u32 %v1338, 7
    %v1340 = vsub.s32 %v589, %v1339
    %v1341 = vrot.slane %v1146, %v1340
    %v1342 = vlaneseq
    %v1343 = vshrl.u32 %v1342, 7
    %v1344 = vsub.s32 %v589, %v1343
    %v1345 = vrot.slane %v1151, %v1344
    %v1346 = vlaneseq
    %v1347 = vshrl.u32 %v1346, 7
    %v1348 = vsub.s32 %v589, %v1347
    %v1349 = vrot.slane %v1156, %v1348
    %v1350 = vsel %vm654, %v1293, %v1289
    %v1351 = vsel %vm656, %v1297, %v1350
    %v1352 = vsel %vm658, %v1301, %v1351
    %v1353 = vsel %vm660, %v1305, %v1352
    %v1354 = vsel %vm662, %v1309, %v1353
    %v1355 = vsel %vm664, %v1313, %v1354
    %v1356 = vsel %vm666, %v1317, %v1355
    %v1357 = vsel %vm654, %v1325, %v1321
    %v1358 = vsel %vm656, %v1329, %v1357
    %v1359 = vsel %vm658, %v1333, %v1358
    %v1360 = vsel %vm660, %v1337, %v1359
    %v1361 = vsel %vm662, %v1341, %v1360
    %v1362 = vsel %vm664, %v1345, %v1361
    %v1363 = vsel %vm666, %v1349, %v1362
    %v1366 = vsel %vm677, %v1356, 0.0
    %v1367 = vsel %vm677, %v1363, 0.0
    %v1384 = vsel %vm654, %v1187, %v1180
    %v1385 = vsel %vm656, %v1194, %v1384
    %v1386 = vsel %vm658, %v1201, %v1385
    %v1387 = vsel %vm660, %v1208, %v1386
    %v1388 = vsel %vm662, %v1215, %v1387
    %v1389 = vsel %vm664, %v1222, %v1388
    %v1390 = vsel %vm666, %v1229, %v1389
    %v1391 = vsel %vm654, %v1243, %v1236
    %v1392 = vsel %vm656, %v1250, %v1391
    %v1393 = vsel %vm658, %v1257, %v1392
    %v1394 = vsel %vm660, %v1264, %v1393
    %v1395 = vsel %vm662, %v1271, %v1394
    %v1396 = vsel %vm664, %v1278, %v1395
    %v1397 = vsel %vm666, %v1285, %v1396
    %v1400 = vsel %vm94, %v1390, 0.0
    %v1401 = vsel %vm94, %v1397, 0.0
    %1402 = vst [vmem:[#allocation11] sm:$0xff] %v1366
    %1403 = vst [vmem:[#allocation11 + $0x8] sm:$0xff] %v1367
    %1404 = vst [vmem:[#allocation10] sm:$0xff] %v1400
    %1405 = vst [vmem:[#allocation10 + $0x8] sm:$0xff] %v1401
    // Predicated region
    $region34: #{tpu_custom_call.1} parent=1 // pred_check
      _
    $region35: #{tpu_custom_call.1} parent=1 // pred_check_branch
      %1407 = sbr.rel (0) target = $region37
    $region36: #{tpu_custom_call.1} parent=1 // pred_region
      %s1409 = ssub.s32 256, 256
      %1410 = vsyncadd [#allocation4], %s1409
      %s1411 = sshll.u32 [#allocation10], 4
      %s1412 = int_to_ptr.vmem [resolvable:$true] %s1411
      %1417 = dma.vmem_to_hbm [thread:$0]  %s1412, 256, %s4, [#allocation4], 128, 128, 8
    $region37: #{tpu_custom_call.1} parent=1 // pred_fallthru
      _
    // Predicated region
    $region38: #{tpu_custom_call.1} parent=1 // pred_check
      _
    $region39: #{tpu_custom_call.1} parent=1 // pred_check_branch
      %1419 = sbr.rel (0) target = $region41
    $region40: #{tpu_custom_call.1} parent=1 // pred_region
      %s1421 = ssub.s32 256, 256
      %1422 = vsyncadd [#allocation12], %s1421
      %s1423 = sshll.u32 [#allocation11], 4
      %s1424 = int_to_ptr.vmem [resolvable:$true] %s1423
      %1429 = dma.vmem_to_hbm [thread:$0]  %s1424, 256, %s5, [#allocation12], 128, 128, 8
    $region41: #{tpu_custom_call.1} parent=1 // pred_fallthru
      _
    // Predicated region
    $region42: #{tpu_custom_call.1} parent=1 // pred_check
      _
    $region43: #{tpu_custom_call.1} parent=1 // pred_check_branch
      %1431 = sbr.rel (0) target = $region45
    $region44: #{tpu_custom_call.1} parent=1 // pred_region
      %1432 = dma.done [#allocation4], 256
    $region45: #{tpu_custom_call.1} parent=1 // pred_fallthru
      _
    // Predicated region
    $region46: #{tpu_custom_call.1} parent=1 // pred_check
      _
    $region47: #{tpu_custom_call.1} parent=1 // pred_check_branch
      %1434 = sbr.rel (0) target = $region49
    $region48: #{tpu_custom_call.1} parent=1 // pred_region
      %1435 = dma.done [#allocation12], 256
    $region49: #{tpu_custom_call.1} parent=1 // pred_fallthru
      _
    %1436 = vsyncpa [#allocation3], 1
    %1437 = vsyncpa [#allocation6], 1
    %1438 = vsyncpa [#allocation9], 1
    %1439 = vsyncpa [#allocation4], 1
    %1440 = vsyncpa [#allocation12], 1

</llo_original>
